<compile_context>
chip_gen: v7x
topology: tpu7x:2x2x1
jax: 0.10.0
libtpu: 0.0.40
codegen_flags: <defaults>
</compile_context>

<pallas_src>
import functools

import jax
import jax.numpy as jnp
from jax.experimental import pallas as pl
from jax.experimental.pallas import tpu as pltpu

K = 7      # conv kernel size
PAD = 3    # conv padding


# --------------------------------------------------------------------------
# Kernel 1: channel reduction (mean + max over C) on the flattened (N, C, HW)
# layout.  Grid = (batch, spatial, channel); the channel axis MUST stay last
# (innermost) -- the output block index is constant across it, so the output
# stays resident in VMEM and acts as the accumulator (written back only when
# the batch/spatial block changes).
# --------------------------------------------------------------------------
def reduce_kernel(x_ref, avg_ref, max_ref, *, inv_c):
    # x_ref   : (Bt, Ct, St) VMEM, native dtype
    # avg_ref : (Bt, 1,  St) VMEM f32  -- channel sum, scaled to mean at the end
    # max_ref : (Bt, 1,  St) VMEM f32  -- running channel max
    ci = pl.program_id(2)
    nc = pl.num_programs(2)

    @pl.when(ci == 0)
    def _():
        avg_ref[...] = jnp.zeros_like(avg_ref)
        # -inf init assumes a floating-point input dtype (f32 / bf16).
        max_ref[...] = jnp.full_like(max_ref, -jnp.inf)

    x = x_ref[...].astype(jnp.float32)          # in-kernel upcast (bf16 OK)
    avg_ref[...] = avg_ref[...] + jnp.sum(x, axis=1, keepdims=True)
    max_ref[...] = jnp.maximum(max_ref[...], jnp.max(x, axis=1, keepdims=True))

    @pl.when(ci == nc - 1)
    def _():
        avg_ref[...] = avg_ref[...] * inv_c     # sum -> mean


# --------------------------------------------------------------------------
# Kernel 2: 7x7 conv (2 in-ch -> 1 out-ch) + bias + sigmoid on the reduced
# maps.  Tiny relative to the reduction; runs once per image.
# --------------------------------------------------------------------------
def conv_kernel(w_ref, b_ref, avg_ref, max_ref, o_ref,
                avg_pad, max_pad, *shift_scr, hoist_kw):
    # w_ref   : (2*K*K,) f32 SMEM -- conv weights, flattened [in_ch, kh, kw]
    # b_ref   : (1,)     f32 SMEM -- conv bias
    # avg_ref : (1, H, W) f32 VMEM
    # max_ref : (1, H, W) f32 VMEM
    # o_ref   : (1, H, W) VMEM, output dtype
    # avg_pad / max_pad : (1, Hp, Wp) f32 persistent scratch (zero border)
    # shift_scr (optional): 2 x (K, 1, Hp, W) f32 -- kw-lane-shifted copies
    _, H, W = o_ref.shape
    Hp, Wp = H + 2 * PAD, W + 2 * PAD

    # Zero only the PAD-wide border strips every step (the interior is fully
    # overwritten below).  This is correct regardless of how the parallel
    # batch axis is split across cores -- no state is carried between steps --
    # and avoids the redundant full-buffer zero + retiling of the old version.
    zrow = jnp.zeros((1, PAD, Wp), jnp.float32)
    zcol = jnp.zeros((1, Hp, PAD), jnp.float32)
    for pad_ref in (avg_pad, max_pad):
        pad_ref[:, 0:PAD, :] = zrow
        pad_ref[:, PAD + H:Hp, :] = zrow
        pad_ref[:, :, 0:PAD] = zcol
        pad_ref[:, :, PAD + W:Wp] = zcol

    avg_pad[:, PAD:PAD + H, PAD:PAD + W] = avg_ref[...]
    max_pad[:, PAD:PAD + H, PAD:PAD + W] = max_ref[...]

    # Hoist the 98 SMEM weight reads out of the unrolled tap loop.
    w = [w_ref[i] for i in range(2 * K * K)]

    if hoist_kw:
        # Hoist the kw lane shifts: 7 shifted copies per map (14 lane shifts)
        # instead of one per tap (98); tap loads below are then lane-aligned.
        avg_sh, max_sh = shift_scr
        for kw in range(K):
            avg_sh[kw] = avg_pad[:, :, kw:kw + W]
            max_sh[kw] = max_pad[:, :, kw:kw + W]

    # Fully unrolled 7x7 conv on the VPU with 4 independent accumulator
    # chains (a single serial chain is VALU-latency bound).
    accs = [
        jnp.full(o_ref.shape, b_ref[0], dtype=jnp.float32),
        jnp.zeros(o_ref.shape, dtype=jnp.float32),
        jnp.zeros(o_ref.shape, dtype=jnp.float32),
        jnp.zeros(o_ref.shape, dtype=jnp.float32),
    ]
    t = 0
    for kh in range(K):
        for kw in range(K):
            if hoist_kw:
                a_sl = avg_sh[kw, :, kh:kh + H, :]
                m_sl = max_sh[kw, :, kh:kh + H, :]
            else:
                # Fallback when the shift scratch would not fit the VMEM
                # budget (large H*W on v7x): slice the pad buffers directly.
                a_sl = avg_pad[:, kh:kh + H, kw:kw + W]
                m_sl = max_pad[:, kh:kh + H, kw:kw + W]
            accs[t % 4] = accs[t % 4] + a_sl * w[kh * K + kw]
            accs[(t + 1) % 4] = accs[(t + 1) % 4] + m_sl * w[K * K + kh * K + kw]
            t += 2
    acc = (accs[0] + accs[1]) + (accs[2] + accs[3])

    # NOTE: for W < 128 this store is lane-masked, but the conv output is only
    # ~1/(2C) of the total data volume -- negligible.
    o_ref[...] = jax.nn.sigmoid(acc).astype(o_ref.dtype)


# --------------------------------------------------------------------------
# Tile selection for the reduction call.
# --------------------------------------------------------------------------
def _reduction_tiles(N, C, HW, itemsize, target_bytes):
    """Pick (batch, channel, spatial) tiles for the (N, C, HW) reduction.

    Ct must be a multiple of 8 or equal C; St a multiple of 128 or equal HW
    (the (8,128) BlockSpec constraint).  Aim for ~target_bytes per input tile.
    """
    st_opts = sorted({d for d in range(128, HW + 1, 128) if HW % d == 0} | {HW})
    ct_opts = sorted({d for d in range(8, C + 1, 8) if C % d == 0} | {C})

    best_ct, best_st = ct_opts[0], st_opts[0]
    best_sz = best_ct * best_st * itemsize
    for ct in ct_opts:
        for st in st_opts:
            sz = ct * st * itemsize
            if sz <= target_bytes and sz > best_sz:
                best_ct, best_st, best_sz = ct, st, sz

    # Fold batch elements only when a whole image already fits one tile.
    bt = 1
    if best_ct == C and best_st == HW:
        per_img = C * HW * itemsize
        divs = [d for d in range(1, N + 1) if N % d == 0]
        cand = [d for d in divs if d * per_img <= target_bytes]
        if cand:
            bt = max(cand)
        if N >= 2 and bt >= N:
            # Keep >= 2 grid steps along the parallel axes (v7x has 2 TCs).
            bt = max([d for d in divs if d <= N // 2] or [1])
    return bt, best_ct, best_st


# --------------------------------------------------------------------------
# Wrapper
# --------------------------------------------------------------------------
def spatial_attention(x, conv_w, conv_b):
    """x: (N, C, H, W); conv_w: (1, 2, 7, 7); conv_b: (1,). Returns (N, 1, H, W)."""
    N, C, H, W = x.shape
    HW = H * W
    Hp, Wp = H + 2 * PAD, W + 2 * PAD
    itemsize = jnp.dtype(x.dtype).itemsize

    # Generation-aware sizing: go bigger on 128-MiB-VMEM parts (v5e/v6e),
    # stay conservative on v7x (64 MiB physical VMEM).
    try:
        vmem_cap = pltpu.get_tpu_info().vmem_capacity_bytes
    except Exception:
        vmem_cap = 64 * 1024 * 1024
    if vmem_cap >= 100 * 1024 * 1024:
        tile_target = 8 * 1024 * 1024
        vmem_limit = 96 * 1024 * 1024
    else:
        tile_target = 3 * 1024 * 1024
        vmem_limit = 48 * 1024 * 1024

    Bt, Ct, St = _reduction_tiles(N, C, HW, itemsize, tile_target)

    # ---------------- Call 1: lane-dense channel reduction ----------------
    x_flat = x.reshape(N, C, HW)    # free for contiguous NCHW

    reduce_spec = pltpu.PrefetchScalarGridSpec(
        num_scalar_prefetch=0,
        grid=(N // Bt, HW // St, C // Ct),          # channel axis LAST (reduction)
        in_specs=[
            pl.BlockSpec((Bt, Ct, St), lambda bi, si, ci: (bi, ci, si)),
        ],
        out_specs=[
            pl.BlockSpec((Bt, 1, St), lambda bi, si, ci: (bi, 0, si)),
            pl.BlockSpec((Bt, 1, St), lambda bi, si, ci: (bi, 0, si)),
        ],
    )
    avg_f, max_f = pl.pallas_call(
        functools.partial(reduce_kernel, inv_c=1.0 / C),
        out_shape=(jax.ShapeDtypeStruct((N, 1, HW), jnp.float32),
                   jax.ShapeDtypeStruct((N, 1, HW), jnp.float32)),
        grid_spec=reduce_spec,
        compiler_params=pltpu.CompilerParams(
            dimension_semantics=("parallel", "parallel", "arbitrary"),
            vmem_limit_bytes=vmem_limit),
    )(x_flat)

    # --------------- Call 2: tiny 7x7 conv + sigmoid epilogue --------------
    avg_hw = avg_f.reshape(N, H, W)
    max_hw = max_f.reshape(N, H, W)
    w_flat = conv_w.reshape(-1).astype(jnp.float32)   # (2*K*K,)
    b_vec = conv_b.reshape(-1).astype(jnp.float32)    # (1,)

    # VMEM budget guard for the hoisted kw-shift copies (v7x: 64 MiB VMEM).
    shift_bytes = 2 * K * Hp * W * 4
    hoist_kw = shift_bytes <= 8 * 1024 * 1024

    scratch = [pltpu.VMEM((1, Hp, Wp), jnp.float32),   # zero-padded mean map
               pltpu.VMEM((1, Hp, Wp), jnp.float32)]   # zero-padded max map
    if hoist_kw:
        scratch += [pltpu.VMEM((K, 1, Hp, W), jnp.float32),
                    pltpu.VMEM((K, 1, Hp, W), jnp.float32)]

    conv_spec = pltpu.PrefetchScalarGridSpec(
        num_scalar_prefetch=0,
        grid=(N,),
        in_specs=[
            pl.BlockSpec(memory_space=pltpu.MemorySpace.SMEM),   # weights
            pl.BlockSpec(memory_space=pltpu.MemorySpace.SMEM),   # bias
            pl.BlockSpec((1, H, W), lambda b: (b, 0, 0)),        # avg map
            pl.BlockSpec((1, H, W), lambda b: (b, 0, 0)),        # max map
        ],
        out_specs=pl.BlockSpec((1, H, W), lambda b: (b, 0, 0)),
        scratch_shapes=scratch,
    )
    out = pl.pallas_call(
        functools.partial(conv_kernel, hoist_kw=hoist_kw),
        out_shape=jax.ShapeDtypeStruct((N, H, W), x.dtype),
        grid_spec=conv_spec,
        compiler_params=pltpu.CompilerParams(
            dimension_semantics=("parallel",),
            vmem_limit_bytes=vmem_limit),
    )(w_flat, b_vec, avg_hw, max_hw)

    return out[:, None, :, :]    # (N, 1, H, W) -- free reshape


# --------------------------------------------------------------------------
# Pure-JAX reference of the PyTorch forward, for verification.
# --------------------------------------------------------------------------
def reference(x, conv_w, conv_b):
    avg = jnp.mean(x, axis=1, keepdims=True)
    mx = jnp.max(x, axis=1, keepdims=True)
    out = jnp.concatenate([avg, mx], axis=1)            # (N, 2, H, W)
    out = jax.lax.conv_general_dilated(
        out, conv_w, window_strides=(1, 1), padding=((PAD, PAD), (PAD, PAD)),
        dimension_numbers=("NCHW", "OIHW", "NCHW"))
    return jax.nn.sigmoid(out + conv_b.reshape(1, -1, 1, 1))


if __name__ == "__main__":
    key = jax.random.PRNGKey(0)
    kx, kw_key, kb_key = jax.random.split(key, 3)

    N, C, H, W = 2, 4, 16, 16
    x = jax.random.normal(kx, (N, C, H, W), dtype=jnp.float32)

    # Deterministic synthetic conv params (shapes match nn.Conv2d(2, 1, 7, padding=3)).
    conv_w = jax.random.normal(kw_key, (1, 2, K, K), dtype=jnp.float32) * 0.1
    conv_b = jax.random.normal(kb_key, (1,), dtype=jnp.float32) * 0.1

    out = spatial_attention(x, conv_w, conv_b)
    out = jax.block_until_ready(out)

    ref = reference(x, conv_w, conv_b)
    assert out.shape == (N, 1, H, W)
    assert jnp.allclose(out, ref, atol=2e-5, rtol=2e-5), "mismatch vs reference"

    print("KERNEL_OK")
</pallas_src>

<mosaic_0001>
module attributes {stable_mosaic.version = 11 : i64} {
  func.func @reduce_kernel(%arg0: i32, %arg1: i32, %arg2: i32, %arg3: memref<1x4x256xf32, #tpu.memory_space<vmem>>, %arg4: memref<1x1x256xf32, #tpu.memory_space<vmem>>, %arg5: memref<1x1x256xf32, #tpu.memory_space<vmem>>) attributes {dimension_semantics = [#tpu.dimension_semantics<parallel>, #tpu.dimension_semantics<parallel>, #tpu.dimension_semantics<arbitrary>], iteration_bounds = array<i64: 2, 1, 1>, scalar_prefetch = 0 : i64, scratch_operands = 0 : i64, tpu.core_type = #tpu.core_type<tc>, window_params = [{transform_indices = @transform_0, window_bounds = array<i64: 1, 4, 256>}, {transform_indices = @transform_1, window_bounds = array<i64: 1, 1, 256>}, {transform_indices = @transform_2, window_bounds = array<i64: 1, 1, 256>}]} {
    %c0_i32 = arith.constant 0 : i32
    %0 = arith.cmpi eq, %arg2, %c0_i32 : i32
    %1 = arith.extui %0 : i1 to i32
    %c0_i32_0 = arith.constant 0 : i32
    %2 = arith.cmpi ne, %1, %c0_i32_0 : i32
    scf.if %2 {
      %cst_18 = arith.constant 0.000000e+00 : f32
      %17 = vector.broadcast %cst_18 : f32 to vector<1x1x256xf32>
      %c0_19 = arith.constant 0 : index
      %c0_20 = arith.constant 0 : index
      %c0_21 = arith.constant 0 : index
      %18 = vector.load %arg4[%c0_19, %c0_20, %c0_21] : memref<1x1x256xf32, #tpu.memory_space<vmem>>, vector<1x1x256xf32>
      tpu.vector_store %arg4[%c0_19, %c0_20, %c0_21], %17 {strides = array<i32>} : memref<1x1x256xf32, #tpu.memory_space<vmem>>, vector<1x1x256xf32>,
      %cst_22 = arith.constant 0xFF800000 : f32
      %19 = vector.broadcast %cst_22 : f32 to vector<1x1x256xf32>
      %c0_23 = arith.constant 0 : index
      %c0_24 = arith.constant 0 : index
      %c0_25 = arith.constant 0 : index
      %20 = vector.load %arg5[%c0_23, %c0_24, %c0_25] : memref<1x1x256xf32, #tpu.memory_space<vmem>>, vector<1x1x256xf32>
      tpu.vector_store %arg5[%c0_23, %c0_24, %c0_25], %19 {strides = array<i32>} : memref<1x1x256xf32, #tpu.memory_space<vmem>>, vector<1x1x256xf32>,
    } else {
    }
    %c0 = arith.constant 0 : index
    %c0_1 = arith.constant 0 : index
    %c0_2 = arith.constant 0 : index
    %3 = vector.load %arg3[%c0, %c0_1, %c0_2] : memref<1x4x256xf32, #tpu.memory_space<vmem>>, vector<1x4x256xf32>
    %c0_3 = arith.constant 0 : index
    %c0_4 = arith.constant 0 : index
    %c0_5 = arith.constant 0 : index
    %4 = vector.load %arg4[%c0_3, %c0_4, %c0_5] : memref<1x1x256xf32, #tpu.memory_space<vmem>>, vector<1x1x256xf32>
    %cst = arith.constant dense<0.000000e+00> : vector<1x256xf32>
    %5 = vector.multi_reduction <add>, %3, %cst [1] : vector<1x4x256xf32> to vector<1x256xf32>
    %6 = vector.shape_cast %5 : vector<1x256xf32> to vector<1x1x256xf32>
    %7 = arith.addf %4, %6 : vector<1x1x256xf32>
    %c0_6 = arith.constant 0 : index
    %c0_7 = arith.constant 0 : index
    %c0_8 = arith.constant 0 : index
    %8 = vector.load %arg4[%c0_6, %c0_7, %c0_8] : memref<1x1x256xf32, #tpu.memory_space<vmem>>, vector<1x1x256xf32>
    tpu.vector_store %arg4[%c0_6, %c0_7, %c0_8], %7 {strides = array<i32>} : memref<1x1x256xf32, #tpu.memory_space<vmem>>, vector<1x1x256xf32>,
    %c0_9 = arith.constant 0 : index
    %c0_10 = arith.constant 0 : index
    %c0_11 = arith.constant 0 : index
    %9 = vector.load %arg5[%c0_9, %c0_10, %c0_11] : memref<1x1x256xf32, #tpu.memory_space<vmem>>, vector<1x1x256xf32>
    %cst_12 = arith.constant dense<0xFF800000> : vector<1x256xf32>
    %10 = vector.multi_reduction <maximumf>, %3, %cst_12 [1] : vector<1x4x256xf32> to vector<1x256xf32>
    %11 = vector.shape_cast %10 : vector<1x256xf32> to vector<1x1x256xf32>
    %12 = arith.maximumf %9, %11 : vector<1x1x256xf32>
    %c0_13 = arith.constant 0 : index
    %c0_14 = arith.constant 0 : index
    %c0_15 = arith.constant 0 : index
    %13 = vector.load %arg5[%c0_13, %c0_14, %c0_15] : memref<1x1x256xf32, #tpu.memory_space<vmem>>, vector<1x1x256xf32>
    tpu.vector_store %arg5[%c0_13, %c0_14, %c0_15], %12 {strides = array<i32>} : memref<1x1x256xf32, #tpu.memory_space<vmem>>, vector<1x1x256xf32>,
    %c0_i32_16 = arith.constant 0 : i32
    %14 = arith.cmpi eq, %arg2, %c0_i32_16 : i32
    %15 = arith.extui %14 : i1 to i32
    %c0_i32_17 = arith.constant 0 : i32
    %16 = arith.cmpi ne, %15, %c0_i32_17 : i32
    scf.if %16 {
      %c0_18 = arith.constant 0 : index
      %c0_19 = arith.constant 0 : index
      %c0_20 = arith.constant 0 : index
      %17 = vector.load %arg4[%c0_18, %c0_19, %c0_20] : memref<1x1x256xf32, #tpu.memory_space<vmem>>, vector<1x1x256xf32>
      %cst_21 = arith.constant 2.500000e-01 : f32
      %18 = vector.broadcast %cst_21 : f32 to vector<1x1x256xf32>
      %19 = arith.mulf %17, %18 : vector<1x1x256xf32>
      %c0_22 = arith.constant 0 : index
      %c0_23 = arith.constant 0 : index
      %c0_24 = arith.constant 0 : index
      %20 = vector.load %arg4[%c0_22, %c0_23, %c0_24] : memref<1x1x256xf32, #tpu.memory_space<vmem>>, vector<1x1x256xf32>
      tpu.vector_store %arg4[%c0_22, %c0_23, %c0_24], %19 {strides = array<i32>} : memref<1x1x256xf32, #tpu.memory_space<vmem>>, vector<1x1x256xf32>,
    } else {
    }
    return
  }
  func.func @transform_0(%arg0: i32, %arg1: i32, %arg2: i32) -> (i32, i32, i32) {
    %c0_i32 = arith.constant 0 : i32
    return %arg0, %arg2, %arg1 : i32, i32, i32
  }
  func.func @transform_1(%arg0: i32, %arg1: i32, %arg2: i32) -> (i32, i32, i32) {
    %c0_i32 = arith.constant 0 : i32
    %c0_i32_0 = arith.constant 0 : i32
    return %arg0, %c0_i32, %arg1 : i32, i32, i32
  }
  func.func @transform_2(%arg0: i32, %arg1: i32, %arg2: i32) -> (i32, i32, i32) {
    %c0_i32 = arith.constant 0 : i32
    %c0_i32_0 = arith.constant 0 : i32
    return %arg0, %c0_i32, %arg1 : i32, i32, i32
  }
}

</mosaic_0001>

<llo_original>
// kernel: tpu_custom_call.1
$region0: #{tpu_custom_call.1}
  #allocation0 [shape = 'u32[]', space=smem, size = 0x4, offset = 0x4, fixed_abs, tag = 'smem constant byte address 0x4 - core index']
  #allocation1 [shape = 'u32[144,128]{1,0:T(1,128)}', space=vmem, size = 0x12000, scoped, tag = 'internal scratch']
  %s0 = inlined_call_operand.hbm [shape: f32[2,4,256], index: 0, kind: input, shape index: {}]
  %s1 = inlined_call_operand.hbm [shape: f32[2,1,256], index: 1, kind: output, shape index: {0}]
  %s2 = inlined_call_operand.hbm [shape: f32[2,1,256], index: 2, kind: output, shape index: {1}]
  %3 = xla_tuple %s1, %s2
  %s4 = sld [smem:[#allocation0]]
  $region57: #{tpu_custom_call.1} parent=0
    _
  %s6 = ssub.s32 1, %s4
  %s7 = scalar_select 0, %s6, %s4
  $region1: #{tpu_custom_call.1} parent=0
    #allocation2 [shape = 'u8[8192]{0}', space=vmem, size = 0x2000, scoped, tag = 'input window, operand 0']
    #allocation3 [shape = 's32[2]{0}', space=sflag, size = 0x8, scoped, tag = 'scoped memory for tpu_custom_call.1']
    #allocation4 [shape = 's32[2]{0}', space=sflag, size = 0x8, scoped, tag = 'scoped memory for tpu_custom_call.1']
    #allocation5 [shape = 'u8[2048]{0}', space=vmem, size = 0x800, scoped, tag = 'output window, operand 0']
    #allocation6 [shape = 'u8[2048]{0}', space=vmem, size = 0x800, scoped, tag = 'output window, operand 1']
    #allocation7 [shape = 's32[2]{0}', space=sflag, size = 0x8, scoped, tag = 'scoped memory for tpu_custom_call.1']
    %8 = vsyncpa [#allocation3], 0
    %s9 = scalar_lea.sflag [#allocation3], 1
    %10 = vsyncpa %s9, 0
    %11 = vsyncpa [#allocation4], 0
    %s12 = scalar_lea.sflag [#allocation4], 1
    %13 = vsyncpa %s12, 0
    %14 = vsyncpa [#allocation7], 0
    %s15 = scalar_lea.sflag [#allocation7], 1
    %16 = vsyncpa %s15, 0
    loop: start=0, step=1, limit=4
    $region2: #{tpu_custom_call.1} parent=1 // loop_pre_header
      _
    $region3: #{tpu_custom_call.1} parent=1 // loop_header
      %s18 = sphi 0, %s22
      %p19 = scmp.ge.s32.totalorder %s18, 4
      %s25 = sphi 0, %s44
      %s26 = sphi 0, %s40
      %s27 = sphi 0, %s36
      %s28 = sphi 0, %s25
      %s29 = sphi 0, %s26
      %s30 = sphi 0, %s27
      %s31 = sphi 0, %s28
      %s32 = sphi 0, %s29
      %s33 = sphi 0, %s30
      %s51 = sphi 0, %s53
      %s54 = sphi 0, %s51
      %s55 = sphi 0, %s54
      %s71 = sphi 0, %s55
      %s79 = sphi 0, %s81
      %s82 = sphi 0, %s79
      %s83 = sphi 0, %s82
      %s99 = sphi 0, %s83
      %s107 = sphi 0, %s109
      %s110 = sphi 0, %s107
      %s111 = sphi 0, %s110
      %s127 = sphi 0, %s111
    $region4: #{tpu_custom_call.1} parent=1 // loop_header_branch
      %21 = sbr.rel (%p19) target = $region8
    $region5: #{tpu_custom_call.1} parent=1 // loop_body
      %s23 = ssub.s32 %s18, 1
      %s24 = ssub.s32 %s18, 2
      %s34 = sadd.s32 1, %s27
      %p35 = scmp.ge.s32.totalorder %s34, 1
      %s36 = scalar_select %p35, 0, %s34
      %s37 = sadd.s32 1, %s26
      %s38 = scalar_select %p35, %s37, %s26
      %p39 = scmp.ge.s32.totalorder %s38, 1
      %s40 = scalar_select %p39, 0, %s38
      %s41 = sadd.s32 1, %s25
      %s42 = scalar_select %p39, %s41, %s25
      %p43 = scmp.ge.s32.totalorder %s42, 2
      %s44 = scalar_select %p43, 0, %s42
      %s45 = ssub.s32 %s25, %s44
      %s46 = ssub.s32 %s27, %s36
      %s47 = sor.u32 %s45, %s46
      %s48 = ssub.s32 %s26, %s40
      %s49 = sor.u32 %s47, %s48
      %p50 = scmp.eq.s32.totalorder %s49, 0
      %s52 = sadd.s32 %s51, 1
      %s53 = scalar_select %p50, %s51, %s52
      %p56 = pneg %p50
      %p57 = scmp.eq.s32.totalorder %s18, 1
      %p58 = por %p56, %p57
      %p59 = scmp.ne.s32.totalorder %s51, %s54
      %p60 = scmp.eq.s32.totalorder %s18, 0
      %p61 = por %p59, %p60
      %p62 = scmp.ne.s32.totalorder %s51, %s54
      %p63 = scmp.eq.s32.totalorder %s23, 1
      %p64 = por %p62, %p63
      %p65 = scmp.ne.s32.totalorder %s54, %s55
      %p66 = scmp.eq.s32.totalorder %s23, 0
      %p67 = por %p65, %p66
      %p68 = scmp.ne.s32.totalorder %s54, %s55
      %p69 = scmp.eq.s32.totalorder %s24, 1
      %p70 = por %p68, %p69
      %p72 = scmp.ne.s32.totalorder %s55, %s71
      %p73 = scmp.eq.s32.totalorder %s24, 0
      %p74 = por %p72, %p73
      %s75 = ssub.s32 %s25, %s44
      %s76 = ssub.s32 %s26, %s40
      %s77 = sor.u32 %s75, %s76
      %p78 = scmp.eq.s32.totalorder %s77, 0
      %s80 = sadd.s32 %s79, 1
      %s81 = scalar_select %p78, %s79, %s80
      %p84 = pneg %p78
      %p85 = scmp.eq.s32.totalorder %s18, 1
      %p86 = por %p84, %p85
      %p87 = scmp.ne.s32.totalorder %s79, %s82
      %p88 = scmp.eq.s32.totalorder %s18, 0
      %p89 = por %p87, %p88
      %p90 = scmp.ne.s32.totalorder %s79, %s82
      %p91 = scmp.eq.s32.totalorder %s23, 1
      %p92 = por %p90, %p91
      %p93 = scmp.ne.s32.totalorder %s82, %s83
      %p94 = scmp.eq.s32.totalorder %s23, 0
      %p95 = por %p93, %p94
      %p96 = scmp.ne.s32.totalorder %s82, %s83
      %p97 = scmp.eq.s32.totalorder %s24, 1
      %p98 = por %p96, %p97
      %p100 = scmp.ne.s32.totalorder %s83, %s99
      %p101 = scmp.eq.s32.totalorder %s24, 0
      %p102 = por %p100, %p101
      %s103 = ssub.s32 %s25, %s44
      %s104 = ssub.s32 %s26, %s40
      %s105 = sor.u32 %s103, %s104
      %p106 = scmp.eq.s32.totalorder %s105, 0
      %s108 = sadd.s32 %s107, 1
      %s109 = scalar_select %p106, %s107, %s108
      %p112 = pneg %p106
      %p113 = scmp.eq.s32.totalorder %s18, 1
      %p114 = por %p112, %p113
      %p115 = scmp.ne.s32.totalorder %s107, %s110
      %p116 = scmp.eq.s32.totalorder %s18, 0
      %p117 = por %p115, %p116
      %p118 = scmp.ne.s32.totalorder %s107, %s110
      %p119 = scmp.eq.s32.totalorder %s23, 1
      %p120 = por %p118, %p119
      %p121 = scmp.ne.s32.totalorder %s110, %s111
      %p122 = scmp.eq.s32.totalorder %s23, 0
      %p123 = por %p121, %p122
      %p124 = scmp.ne.s32.totalorder %s110, %s111
      %p125 = scmp.eq.s32.totalorder %s24, 1
      %p126 = por %p124, %p125
      %p128 = scmp.ne.s32.totalorder %s111, %s127
      %p129 = scmp.eq.s32.totalorder %s24, 0
      %p130 = por %p128, %p129
      %p131 = scmp.le.s32.totalorder 1, %s18
      %p132 = scmp.lt.s32.totalorder %s18, 3
      %p133 = pnand %p131, %p132
      %p134 = pneg %p133
      // Predicated region
      $region9: #{tpu_custom_call.1} parent=5 // pred_check
        _
      $region10: #{tpu_custom_call.1} parent=5 // pred_check_branch
        %136 = sbr.rel (%p133) target = $region12
      $region11: #{tpu_custom_call.1} parent=5 // pred_region
        %s137 = ssub.s32 %s18, 1
      $region12: #{tpu_custom_call.1} parent=5 // pred_fallthru
        _
      %p138 = scmp.lt.s32.totalorder %s18, 2
      // Predicated region
      $region13: #{tpu_custom_call.1} parent=5 // pred_check
        %p139 = pneg %p138
      $region14: #{tpu_custom_call.1} parent=5 // pred_check_branch
        %141 = sbr.rel (%p139) target = $region16
      $region15: #{tpu_custom_call.1} parent=5 // pred_region
        // Predicated region
        $region17: #{tpu_custom_call.1} parent=15 // pred_check
          %p142 = pneg %p61
        $region18: #{tpu_custom_call.1} parent=15 // pred_check_branch
          %144 = sbr.rel (%p142) target = $region20
        $region19: #{tpu_custom_call.1} parent=15 // pred_region
          %s145 = sand.u32 %s51, 1
          %s146 = scalar_lea.sflag [#allocation3], %s145
          %s147 = sand.u32 %s51, 1
          %s148 = smul.addr %s147, 8
          %s149 = scalar_lea.vmem [#allocation2], %s148
          %s150 = smul.u32 2, %s26
          %s152 = ssub.s32 128, 128
          %153 = vsyncadd %s146, %s152
          %s154 = smul.addr %s27, 2
          %s155 = sadd.s32 %s150, %s154
          %s156 = smul.addr %s25, 2
          %s157 = sadd.s32 %s155, %s156
          %s158 = smul.addr %s157, 64
          %s159 = scalar_lea.hbm %s0, %s158
          %s161 = sshll.u32 %s149, 4
          %s162 = int_to_ptr.vmem [resolvable:$true] %s161
          %164 = dma.hbm_to_vmem [thread:$0]  %s159, 128, %s162, %s146
        $region20: #{tpu_custom_call.1} parent=15 // pred_fallthru
          _
      $region16: #{tpu_custom_call.1} parent=5 // pred_fallthru
        _
      %p165 = scmp.le.s32.totalorder 1, %s18
      %p166 = scmp.lt.s32.totalorder %s18, 3
      %p167 = pnand %p165, %p166
      %p168 = pneg %p167
      // Predicated region
      $region21: #{tpu_custom_call.1} parent=5 // pred_check
        _
      $region22: #{tpu_custom_call.1} parent=5 // pred_check_branch
        %170 = sbr.rel (%p167) target = $region24
      $region23: #{tpu_custom_call.1} parent=5 // pred_region
        %s171 = ssub.s32 %s18, 1
        %s172 = sand.u32 %s54, 1
        %s173 = scalar_lea.sflag [#allocation3], %s172
        %s174 = sand.u32 %s54, 1
        %s175 = smul.addr %s174, 8
        %s176 = scalar_lea.vmem [#allocation2], %s175
        // Predicated region
        $region25: #{tpu_custom_call.1} parent=23 // pred_check
          %p177 = pneg %p67
        $region26: #{tpu_custom_call.1} parent=23 // pred_check_branch
          %179 = sbr.rel (%p177) target = $region28
        $region27: #{tpu_custom_call.1} parent=23 // pred_region
          %180 = dma.done %s173, 128
        $region28: #{tpu_custom_call.1} parent=23 // pred_fallthru
          _
        %s181 = sand.u32 %s54, 1
        %s182 = scalar_lea.sflag [#allocation3], %s181
        %s183 = sand.u32 %s54, 1
        %s184 = smul.addr %s183, 8
        %s185 = scalar_lea.vmem [#allocation2], %s184
        %p186 = pneg %p67
        %p187 = pneg %p64
        %p188 = pneg %p95
        %p189 = pneg %p92
        %s190 = sand.u32 %s82, 1
        %s191 = scalar_lea.sflag [#allocation4], %s190
        %s192 = sand.u32 %s82, 1
        %s193 = smul.addr %s192, 2
        %s194 = scalar_lea.vmem [#allocation5], %s193
        %p195 = pneg %p123
        %p196 = pneg %p120
        %s197 = sand.u32 %s110, 1
        %s198 = scalar_lea.sflag [#allocation7], %s197
        %s199 = sand.u32 %s110, 1
        %s200 = smul.addr %s199, 2
        %s201 = scalar_lea.vmem [#allocation6], %s200
        %s202 = smul.u32 2, %s29
        %s203 = smul.u32 2, %s29
        %s204 = smul.u32 2, %s29
        %p205 = scmp.eq.s32.totalorder %s30, 0
        // Predicated region
        $region29: #{tpu_custom_call.1} parent=23 // pred_check
          %p206 = pneg %p205
        $region30: #{tpu_custom_call.1} parent=23 // pred_check_branch
          %208 = sbr.rel (%p206) target = $region32
        $region31: #{tpu_custom_call.1} parent=23 // pred_region
          %v209 = vlaneseq
          %vm210 = vcmp.ge.s32.totalorder %v209, 0
          %vm211 = vcmp.lt.s32.totalorder %v209, 256
          %vm212 = vmand %vm210, %vm211
          %213 = vst.msk [vmem:[%s194] sm:$0x3] %vm212, 0.0
          %214 = vst.msk [vmem:[%s201] sm:$0x3] %vm212, -inf
        $region32: #{tpu_custom_call.1} parent=23 // pred_fallthru
          _
        %v215 = vld [vmem:[%s176] sm:$0xff]
        %v216 = vld [vmem:[%s194] sm:$0x3]
        %v218 = vcombine.high %v215, %v215
        %vm220 = vcmask 1043456
        %v221 = vsel %vm220, %v215, 0.0
        %v222 = vrot.slane %v221, 4
        %v223 = vadd.f32 %v221, %v222
        %v224 = vrot.slane %v223, 2
        %v225 = vadd.f32 %v223, %v224
        %v226 = vrot.slane %v225, 1
        %v227 = vadd.f32 %v225, %v226
        %v228 = vsel %vm220, %v218, 0.0
        %v229 = vrot.slane %v228, 4
        %v230 = vadd.f32 %v228, %v229
        %v231 = vrot.slane %v230, 2
        %v232 = vadd.f32 %v230, %v231
        %v233 = vrot.slane %v232, 1
        %v234 = vadd.f32 %v232, %v233
        %v237 = vcombine.low %v227, %v234
        %v239 = vunpack.c.l.s4 1966171168
        %v240 = vunpack.c.0.s8 %v239
        %v241 = vlaneseq
        %v242 = vshrl.u32 %v241, 7
        %v243 = vsub.s32 %v240, %v242
        %v244 = vrot.slane %v237, %v243
        %v246 = vunpack.c.l.s4 1966171168
        %v247 = vunpack.c.0.s8 %v246
        %v248 = vlaneseq
        %v249 = vshrl.u32 %v248, 7
        %v250 = vsub.s32 %v247, %v249
        %v251 = vrot.slane %v244, %v250
        %v253 = vadd.f32 %v216, %v251
        %v254 = vlaneseq
        %vm255 = vcmp.ge.s32.totalorder %v254, 0
        %vm256 = vcmp.lt.s32.totalorder %v254, 256
        %vm257 = vmand %vm255, %vm256
        %258 = vst.msk [vmem:[%s194] sm:$0x3] %vm257, %v253
        %v259 = vld [vmem:[%s201] sm:$0x3]
        %v260 = vsel %vm220, %v215, -inf
        %v261 = vrot.slane %v260, 4
        %v262 = vmax.f32 %v260, %v261
        %v263 = vrot.slane %v262, 2
        %v264 = vmax.f32 %v262, %v263
        %v265 = vrot.slane %v264, 1
        %v266 = vmax.f32 %v264, %v265
        %v267 = vsel %vm220, %v218, -inf
        %v268 = vrot.slane %v267, 4
        %v269 = vmax.f32 %v267, %v268
        %v270 = vrot.slane %v269, 2
        %v271 = vmax.f32 %v269, %v270
        %v272 = vrot.slane %v271, 1
        %v273 = vmax.f32 %v271, %v272
        %v276 = vcombine.low %v266, %v273
        %v278 = vunpack.c.l.s4 1966171168
        %v279 = vunpack.c.0.s8 %v278
        %v280 = vlaneseq
        %v281 = vshrl.u32 %v280, 7
        %v282 = vsub.s32 %v279, %v281
        %v283 = vrot.slane %v276, %v282
        %v285 = vunpack.c.l.s4 1966171168
        %v286 = vunpack.c.0.s8 %v285
        %v287 = vlaneseq
        %v288 = vshrl.u32 %v287, 7
        %v289 = vsub.s32 %v286, %v288
        %v290 = vrot.slane %v283, %v289
        %v292 = vmax.f32 %v259, %v290
        %293 = vst.msk [vmem:[%s201] sm:$0x3] %vm257, %v292
        // Predicated region
        $region33: #{tpu_custom_call.1} parent=23 // pred_check
          %p294 = pneg %p205
        $region34: #{tpu_custom_call.1} parent=23 // pred_check_branch
          %296 = sbr.rel (%p294) target = $region36
        $region35: #{tpu_custom_call.1} parent=23 // pred_region
          %v297 = vld [vmem:[%s194] sm:$0x3]
          %v298 = vmul.f32 %v297, 0.25
          %299 = vst.msk [vmem:[%s194] sm:$0x3] %vm257, %v298
        $region36: #{tpu_custom_call.1} parent=23 // pred_fallthru
          _
        %s300 = sand.u32 %s82, 1
        %s301 = scalar_lea.sflag [#allocation4], %s300
        %s302 = sand.u32 %s82, 1
        %s303 = smul.addr %s302, 2
        %s304 = scalar_lea.vmem [#allocation5], %s303
        %s305 = sand.u32 %s110, 1
        %s306 = scalar_lea.sflag [#allocation7], %s305
        %s307 = sand.u32 %s110, 1
        %s308 = smul.addr %s307, 2
        %s309 = scalar_lea.vmem [#allocation6], %s308
        // Predicated region
        $region37: #{tpu_custom_call.1} parent=23 // pred_check
          %p310 = pneg %p92
        $region38: #{tpu_custom_call.1} parent=23 // pred_check_branch
          %312 = sbr.rel (%p310) target = $region40
        $region39: #{tpu_custom_call.1} parent=23 // pred_region
          %s313 = smul.u32 2, %s29
          %s315 = ssub.s32 32, 32
          %316 = vsyncadd %s301, %s315
          %s317 = smul.addr %s28, 2
          %s318 = sadd.s32 %s313, %s317
          %s319 = smul.addr %s318, 16
          %s320 = scalar_lea.hbm %s1, %s319
          %s322 = sshll.u32 %s304, 4
          %s323 = int_to_ptr.vmem [resolvable:$true] %s322
          %325 = dma.vmem_to_hbm [thread:$0]  %s323, 32, %s320, %s301
        $region40: #{tpu_custom_call.1} parent=23 // pred_fallthru
          _
        // Predicated region
        $region41: #{tpu_custom_call.1} parent=23 // pred_check
          %p326 = pneg %p120
        $region42: #{tpu_custom_call.1} parent=23 // pred_check_branch
          %328 = sbr.rel (%p326) target = $region44
        $region43: #{tpu_custom_call.1} parent=23 // pred_region
          %s329 = smul.u32 2, %s29
          %s331 = ssub.s32 32, 32
          %332 = vsyncadd %s306, %s331
          %s333 = smul.addr %s28, 2
          %s334 = sadd.s32 %s329, %s333
          %s335 = smul.addr %s334, 16
          %s336 = scalar_lea.hbm %s2, %s335
          %s338 = sshll.u32 %s309, 4
          %s339 = int_to_ptr.vmem [resolvable:$true] %s338
          %341 = dma.vmem_to_hbm [thread:$0]  %s339, 32, %s336, %s306
        $region44: #{tpu_custom_call.1} parent=23 // pred_fallthru
          _
      $region24: #{tpu_custom_call.1} parent=5 // pred_fallthru
        _
      %p342 = scmp.le.s32.totalorder 2, %s18
      // Predicated region
      $region45: #{tpu_custom_call.1} parent=5 // pred_check
        %p343 = pneg %p342
      $region46: #{tpu_custom_call.1} parent=5 // pred_check_branch
        %345 = sbr.rel (%p343) target = $region48
      $region47: #{tpu_custom_call.1} parent=5 // pred_region
        %s346 = ssub.s32 %s18, 2
        // Predicated region
        $region49: #{tpu_custom_call.1} parent=47 // pred_check
          %p347 = pneg %p98
        $region50: #{tpu_custom_call.1} parent=47 // pred_check_branch
          %349 = sbr.rel (%p347) target = $region52
        $region51: #{tpu_custom_call.1} parent=47 // pred_region
          %s350 = sand.u32 %s83, 1
          %s351 = scalar_lea.sflag [#allocation4], %s350
          %s352 = sand.u32 %s83, 1
          %s353 = smul.addr %s352, 2
          %s354 = scalar_lea.vmem [#allocation5], %s353
          %355 = dma.done %s351, 32
        $region52: #{tpu_custom_call.1} parent=47 // pred_fallthru
          _
        // Predicated region
        $region53: #{tpu_custom_call.1} parent=47 // pred_check
          %p356 = pneg %p126
        $region54: #{tpu_custom_call.1} parent=47 // pred_check_branch
          %358 = sbr.rel (%p356) target = $region56
        $region55: #{tpu_custom_call.1} parent=47 // pred_region
          %s359 = sand.u32 %s111, 1
          %s360 = scalar_lea.sflag [#allocation7], %s359
          %s361 = sand.u32 %s111, 1
          %s362 = smul.addr %s361, 2
          %s363 = scalar_lea.vmem [#allocation6], %s362
          %364 = dma.done %s360, 32
        $region56: #{tpu_custom_call.1} parent=47 // pred_fallthru
          _
      $region48: #{tpu_custom_call.1} parent=5 // pred_fallthru
        _
    $region6: #{tpu_custom_call.1} parent=1 // loop_footer
      %s22 = sadd.s32 1, %s18
    $region7: #{tpu_custom_call.1} parent=1 // loop_footer_branch
      %17 = sbr.rel target = $region3
    $region8: #{tpu_custom_call.1} parent=1 // loop_exit
      _
    %365 = vsyncpa [#allocation3], 1
    %s366 = scalar_lea.sflag [#allocation3], 1
    %367 = vsyncpa %s366, 1
    %368 = vsyncpa [#allocation4], 1
    %s369 = scalar_lea.sflag [#allocation4], 1
    %370 = vsyncpa %s369, 1
    %371 = vsyncpa [#allocation7], 1
    %s372 = scalar_lea.sflag [#allocation7], 1
    %373 = vsyncpa %s372, 1

</llo_original>
